<compile_context>
chip_gen: v7x
topology: tpu7x:2x2x1
jax: 0.10.0
libtpu: 0.0.40
codegen_flags: <defaults>
</compile_context>

<pallas_src>
import functools
import math

import jax
import jax.numpy as jnp
from jax import lax
from jax.experimental import pallas as pl
from jax.experimental.pallas import tpu as pltpu

_DEFAULT_ALPHA = 1e-06
_LANE = 128
_SUBLANE = 8
_DEFAULT_BLOCK_ELEMS = 256 * 1024      # ~1 MiB per f32 block buffer


def _round_up(x, m):
    return (x + m - 1) // m * m


def _plan(B, D, block_elems):
    """Choose slab shape, block shape and grid for a (B, D) problem.

    Returns (slab_shape, block_shape, grid, mask_last, valid) where `valid` is
    the number of valid entries along the (possibly ragged) reduction axis of
    a block: feature-rows for 3-D blocks, lanes for 2-D blocks.
    """
    if D % _LANE == 0:
        # View each row's D features as an (S, 128) slab: sublane utilization
        # is set by ts (multiple of 8 or == S), independent of the batch size.
        S = D // _LANE
        cap = max(_SUBLANE, block_elems // _LANE)
        ts = S if S <= cap else (cap // _SUBLANE) * _SUBLANE
        tb = max(1, block_elems // (ts * _LANE))
        tb = min(tb, B)
        if B >= 2:                      # >= 2 parallel blocks (v7x: 2 TCs)
            tb = min(tb, pl.cdiv(B, 2))
        slab = (B, S, _LANE)
        block = (tb, ts, _LANE)
        grid = (pl.cdiv(B, tb), pl.cdiv(S, ts))
        return slab, block, grid, (S % ts) != 0, S

    # Fallback: D not a multiple of 128 -> 2-D (B, D) blocks; the ragged last
    # lane block is masked on the final reduction step only.
    td = min(2048, _round_up(D, _LANE))
    row_budget = max(1, block_elems // td)
    if B <= _SUBLANE:
        tb = B                                    # block dim == full array dim
    else:
        tb_cap = max(_SUBLANE, (row_budget // _SUBLANE) * _SUBLANE)
        tb = min(tb_cap, max(_SUBLANE, (B // 2 // _SUBLANE) * _SUBLANE))
    slab = (B, D)
    block = (tb, td)
    grid = (pl.cdiv(B, tb), pl.cdiv(D, td))
    return slab, block, grid, True, D


def _stable_sigmoid(y):
    """Numerically stable sigmoid; also returns exp(-|y|) and |y| for reuse."""
    abs_y = jnp.abs(y)
    e = jnp.exp(-abs_y)                   # in (0, 1]
    inv = 1.0 / (1.0 + e)
    sig = jnp.where(y >= 0.0, inv, e * inv)
    return sig, e, abs_y


def _sigmoid_only_kernel(y_ref, x_ref, *, alpha):
    y = y_ref[...].astype(jnp.float32)
    sig, _, _ = _stable_sigmoid(y)
    x_ref[...] = ((sig - alpha) * (1.0 / (1.0 - 2.0 * alpha))).astype(x_ref.dtype)


def _sigmoid_logdet_kernel(y_ref, x_ref, ld_ref, *, alpha, valid, mask_last):
    """y/x blocks: (tb, ts, 128) or (tb, td); ld block: (tb, 1, 128) f32.

    ld_ref's index map is constant along the trailing ("arbitrary") grid axis,
    so the output block stays resident in VMEM and serves as the accumulator.
    """
    k = pl.program_id(1)
    last = pl.num_programs(1) - 1

    @pl.when(k == 0)
    def _():
        ld_ref[...] = jnp.zeros_like(ld_ref)

    y = y_ref[...].astype(jnp.float32)
    sig, e, abs_y = _stable_sigmoid(y)
    x_ref[...] = ((sig - alpha) * (1.0 / (1.0 - 2.0 * alpha))).astype(x_ref.dtype)

    # Exact, saturation-safe per-element log|det dsigmoid|:
    #   -log(sig) - log(1-sig) + log(1-2a) = |y| + 2*log1p(exp(-|y|)) + log(1-2a)
    ldg = abs_y + 2.0 * jnp.log1p(e) + math.log(1.0 - 2.0 * alpha)

    def fold(v):
        # Per-batch-row partial sum folded into a lane-dense (tb, 1, 128) tile.
        if v.ndim == 3:                                    # (tb, ts, 128)
            return v.sum(axis=1, keepdims=True)
        tb, td = v.shape                                   # (tb, td), td % 128 == 0
        return v.reshape(tb, td // _LANE, _LANE).sum(axis=1, keepdims=True)

    if mask_last:
        @pl.when(k != last)
        def _():
            ld_ref[...] += fold(ldg)

        @pl.when(k == last)
        def _():
            # Only the final block along the reduction axis can be ragged;
            # mask with a select (not multiply) so undefined OOB input data
            # cannot leak NaNs into the accumulator.
            size = ldg.shape[1]
            idx = k * size + lax.broadcasted_iota(jnp.int32, ldg.shape, 1)
            ld_ref[...] += fold(jnp.where(idx < valid, ldg, 0.0))
    else:
        ld_ref[...] += fold(ldg)


def sigmoid_transform_forward(y, logpy=None, alpha=_DEFAULT_ALPHA, *,
                              block_elems=_DEFAULT_BLOCK_ELEMS):
    """Pallas SigmoidTransform.forward(x, logpx, reverse=False), effective_shape=None."""
    orig_shape = y.shape
    B = int(orig_shape[0])
    D = 1
    for d in orig_shape[1:]:
        D *= int(d)

    slab, block, grid, mask_last, valid = _plan(B, D, block_elems)
    y_slab = y.reshape(slab)              # layout-preserving view, no HBM copy

    if len(slab) == 3:
        data_spec = pl.BlockSpec(block, lambda i, k: (i, k, 0))
    else:
        data_spec = pl.BlockSpec(block, lambda i, k: (i, k))

    if logpy is None:
        # Purely elementwise: no log-det work, both grid axes parallel.
        x_slab = pl.pallas_call(
            functools.partial(_sigmoid_only_kernel, alpha=alpha),
            out_shape=jax.ShapeDtypeStruct(slab, y.dtype),
            grid_spec=pltpu.PrefetchScalarGridSpec(
                num_scalar_prefetch=0, grid=grid,
                in_specs=[data_spec], out_specs=data_spec),
            compiler_params=pltpu.CompilerParams(
                dimension_semantics=("parallel", "parallel"),
                vmem_limit_bytes=32 * 1024 * 1024),
        )(y_slab)
        return x_slab.reshape(orig_shape)

    tb = block[0]
    ld_spec = pl.BlockSpec((tb, 1, _LANE), lambda i, k: (i, 0, 0))

    x_slab, ld128 = pl.pallas_call(
        functools.partial(_sigmoid_logdet_kernel, alpha=alpha,
                          valid=valid, mask_last=mask_last),
        out_shape=(jax.ShapeDtypeStruct(slab, y.dtype),
                   jax.ShapeDtypeStruct((B, 1, _LANE), jnp.float32)),
        grid_spec=pltpu.PrefetchScalarGridSpec(
            num_scalar_prefetch=0, grid=grid,
            in_specs=[data_spec],
            out_specs=(data_spec, ld_spec)),
        compiler_params=pltpu.CompilerParams(
            dimension_semantics=("parallel", "arbitrary"),
            vmem_limit_bytes=32 * 1024 * 1024),
    )(y_slab)

    # Final 128 -> 1 fold and the logpy add are tiny (B, 128) XLA ops.
    logdet = ld128.reshape(B, _LANE).sum(axis=-1, keepdims=True)
    logpz = logpy + logdet.astype(logpy.dtype)
    return x_slab.reshape(orig_shape), logpz


# TODO(synk): reverse=True (_logit) path and effective_shape != None of
# SigmoidTransform are not implemented; only the forward (sigmoid) direction
# with effective_shape=None is translated, matching the original kernel scope.


def _reference_forward(y, logpy, alpha=_DEFAULT_ALPHA):
    x = (jax.nn.sigmoid(y) - alpha) / (1.0 - 2.0 * alpha)
    if logpy is None:
        return x, None
    s = alpha + (1.0 - 2.0 * alpha) * x
    ldg = -jnp.log(s - s * s) + math.log(1.0 - 2.0 * alpha)
    B = y.shape[0]
    return x, logpy + ldg.reshape(B, -1).sum(axis=1, keepdims=True)


def _check(y, logpy, **kw):
    x, logpz = sigmoid_transform_forward(y, logpy, **kw)
    jax.block_until_ready(x)
    jax.block_until_ready(logpz)
    x_ref, logpz_ref = _reference_forward(y, logpy)
    assert jnp.allclose(x, x_ref, atol=1e-5, rtol=1e-5), "x mismatch"
    assert jnp.allclose(logpz, logpz_ref, atol=1e-3, rtol=1e-5), "logpz mismatch"


if __name__ == "__main__":
    key = jax.random.PRNGKey(0)
    k1, k2, k3, k4 = jax.random.split(key, 4)

    # Main shape implied by the module: NCHW, B=2, C=4, 16x16 (D=1024 -> 3-D path).
    y = jax.random.normal(k1, (2, 4, 16, 16), dtype=jnp.float32)
    logpy = jax.random.normal(k2, (2, 1), dtype=jnp.float32)
    _check(y, logpy)

    # x-only (logpx=None) path.
    x_only = sigmoid_transform_forward(y)
    jax.block_until_ready(x_only)
    x_ref, _ = _reference_forward(y, None)
    assert jnp.allclose(x_only, x_ref, atol=1e-5, rtol=1e-5)

    # Multi-step, masked reduction axis in the 3-D path (small forced blocks:
    # D=1280 -> S=10 covered by two ts=8 steps, last one ragged/masked).
    y2 = jax.random.normal(k3, (2, 5, 16, 16), dtype=jnp.float32)
    logpy2 = jax.random.normal(k4, (2, 1), dtype=jnp.float32)
    _check(y2, logpy2, block_elems=1024)

    # Ragged batch blocks (B=3 -> tb=2 -> last batch block half out-of-bounds).
    y3 = jax.random.normal(k3, (3, 4, 16, 16), dtype=jnp.float32)
    logpy3 = jax.random.normal(k4, (3, 1), dtype=jnp.float32)
    _check(y3, logpy3)

    # D not a multiple of 128 (2-D fallback) with a 2-step, masked reduction
    # axis: D = 3*30*30 = 2700 -> td = 2048.
    y4 = jax.random.normal(k3, (4, 3, 30, 30), dtype=jnp.float32)
    logpy4 = jax.random.normal(k4, (4, 1), dtype=jnp.float32)
    _check(y4, logpy4)

    print("KERNEL_OK")
</pallas_src>

<mosaic_0001>
module attributes {stable_mosaic.version = 11 : i64} {
  func.func @_sigmoid_logdet_kernel(%arg0: i32, %arg1: i32, %arg2: memref<1x8x128xf32, #tpu.memory_space<vmem>>, %arg3: memref<1x8x128xf32, #tpu.memory_space<vmem>>, %arg4: memref<1x1x128xf32, #tpu.memory_space<vmem>>) attributes {dimension_semantics = [#tpu.dimension_semantics<parallel>, #tpu.dimension_semantics<arbitrary>], iteration_bounds = array<i64: 2, 1>, scalar_prefetch = 0 : i64, scratch_operands = 0 : i64, tpu.core_type = #tpu.core_type<tc>, window_params = [{transform_indices = @transform_0, window_bounds = array<i64: 1, 8, 128>}, {transform_indices = @transform_1, window_bounds = array<i64: 1, 8, 128>}, {transform_indices = @transform_2, window_bounds = array<i64: 1, 1, 128>}]} {
    %c0_i32 = arith.constant 0 : i32
    %0 = arith.cmpi eq, %arg1, %c0_i32 : i32
    %1 = arith.extui %0 : i1 to i32
    %c0_i32_0 = arith.constant 0 : i32
    %2 = arith.cmpi ne, %1, %c0_i32_0 : i32
    scf.if %2 {
      %cst_20 = arith.constant 0.000000e+00 : f32
      %32 = vector.broadcast %cst_20 : f32 to vector<1x1x128xf32>
      %c0_21 = arith.constant 0 : index
      %c0_22 = arith.constant 0 : index
      %c0_23 = arith.constant 0 : index
      %33 = vector.load %arg4[%c0_21, %c0_22, %c0_23] : memref<1x1x128xf32, #tpu.memory_space<vmem>>, vector<1x1x128xf32>
      tpu.vector_store %arg4[%c0_21, %c0_22, %c0_23], %32 {strides = array<i32>} : memref<1x1x128xf32, #tpu.memory_space<vmem>>, vector<1x1x128xf32>,
    } else {
    }
    %c0 = arith.constant 0 : index
    %c0_1 = arith.constant 0 : index
    %c0_2 = arith.constant 0 : index
    %3 = vector.load %arg2[%c0, %c0_1, %c0_2] : memref<1x8x128xf32, #tpu.memory_space<vmem>>, vector<1x8x128xf32>
    %4 = math.absf %3 : vector<1x8x128xf32>
    %cst = arith.constant 0.000000e+00 : f32
    %5 = vector.broadcast %cst : f32 to vector<1x8x128xf32>
    %6 = arith.subf %5, %4 : vector<1x8x128xf32>
    %7 = math.exp %6 : vector<1x8x128xf32>
    %cst_3 = arith.constant 1.000000e+00 : f32
    %8 = vector.broadcast %cst_3 : f32 to vector<1x8x128xf32>
    %9 = arith.addf %8, %7 : vector<1x8x128xf32>
    %cst_4 = arith.constant 1.000000e+00 : f32
    %10 = vector.broadcast %cst_4 : f32 to vector<1x8x128xf32>
    %11 = arith.divf %10, %9 : vector<1x8x128xf32>
    %cst_5 = arith.constant 0.000000e+00 : f32
    %12 = vector.broadcast %cst_5 : f32 to vector<1x8x128xf32>
    %13 = arith.cmpf oge, %3, %12 : vector<1x8x128xf32>
    %14 = arith.mulf %7, %11 : vector<1x8x128xf32>
    %15 = arith.select %13, %11, %14 : vector<1x8x128xi1>, vector<1x8x128xf32>
    %cst_6 = arith.constant 9.99999997E-7 : f32
    %16 = vector.broadcast %cst_6 : f32 to vector<1x8x128xf32>
    %17 = arith.subf %15, %16 : vector<1x8x128xf32>
    %cst_7 = arith.constant 1.00000203 : f32
    %18 = vector.broadcast %cst_7 : f32 to vector<1x8x128xf32>
    %19 = arith.mulf %17, %18 : vector<1x8x128xf32>
    %c0_8 = arith.constant 0 : index
    %c0_9 = arith.constant 0 : index
    %c0_10 = arith.constant 0 : index
    %20 = vector.load %arg3[%c0_8, %c0_9, %c0_10] : memref<1x8x128xf32, #tpu.memory_space<vmem>>, vector<1x8x128xf32>
    tpu.vector_store %arg3[%c0_8, %c0_9, %c0_10], %19 {strides = array<i32>} : memref<1x8x128xf32, #tpu.memory_space<vmem>>, vector<1x8x128xf32>,
    %21 = math.log1p %7 : vector<1x8x128xf32>
    %cst_11 = arith.constant 2.000000e+00 : f32
    %22 = vector.broadcast %cst_11 : f32 to vector<1x8x128xf32>
    %23 = arith.mulf %22, %21 : vector<1x8x128xf32>
    %24 = arith.addf %4, %23 : vector<1x8x128xf32>
    %cst_12 = arith.constant -2.00000204E-6 : f32
    %25 = vector.broadcast %cst_12 : f32 to vector<1x8x128xf32>
    %26 = arith.addf %24, %25 : vector<1x8x128xf32>
    %c0_13 = arith.constant 0 : index
    %c0_14 = arith.constant 0 : index
    %c0_15 = arith.constant 0 : index
    %27 = vector.load %arg4[%c0_13, %c0_14, %c0_15] : memref<1x1x128xf32, #tpu.memory_space<vmem>>, vector<1x1x128xf32>
    %cst_16 = arith.constant dense<0.000000e+00> : vector<1x128xf32>
    %28 = vector.multi_reduction <add>, %26, %cst_16 [1] : vector<1x8x128xf32> to vector<1x128xf32>
    %29 = vector.shape_cast %28 : vector<1x128xf32> to vector<1x1x128xf32>
    %30 = arith.addf %27, %29 : vector<1x1x128xf32>
    %c0_17 = arith.constant 0 : index
    %c0_18 = arith.constant 0 : index
    %c0_19 = arith.constant 0 : index
    %31 = vector.load %arg4[%c0_17, %c0_18, %c0_19] : memref<1x1x128xf32, #tpu.memory_space<vmem>>, vector<1x1x128xf32>
    tpu.vector_store %arg4[%c0_17, %c0_18, %c0_19], %30 {strides = array<i32>} : memref<1x1x128xf32, #tpu.memory_space<vmem>>, vector<1x1x128xf32>,
    return
  }
  func.func @transform_0(%arg0: i32, %arg1: i32) -> (i32, i32, i32) {
    %c0_i32 = arith.constant 0 : i32
    %c0_i32_0 = arith.constant 0 : i32
    return %arg0, %arg1, %c0_i32 : i32, i32, i32
  }
  func.func @transform_1(%arg0: i32, %arg1: i32) -> (i32, i32, i32) {
    %c0_i32 = arith.constant 0 : i32
    %c0_i32_0 = arith.constant 0 : i32
    return %arg0, %arg1, %c0_i32 : i32, i32, i32
  }
  func.func @transform_2(%arg0: i32, %arg1: i32) -> (i32, i32, i32) {
    %c0_i32 = arith.constant 0 : i32
    %c0_i32_0 = arith.constant 0 : i32
    %c0_i32_1 = arith.constant 0 : i32
    return %arg0, %c0_i32, %c0_i32_0 : i32, i32, i32
  }
}

</mosaic_0001>

<llo_original>
// kernel: tpu_custom_call.1
$region0: #{tpu_custom_call.1}
  #allocation0 [shape = 'u32[]', space=smem, size = 0x4, offset = 0x4, fixed_abs, tag = 'smem constant byte address 0x4 - core index']
  #allocation1 [shape = 'u32[144,128]{1,0:T(1,128)}', space=vmem, size = 0x12000, scoped, tag = 'internal scratch']
  %s0 = inlined_call_operand.hbm [shape: f32[2,8,128], index: 0, kind: input, shape index: {}]
  %s1 = inlined_call_operand.hbm [shape: f32[2,8,128], index: 1, kind: output, shape index: {0}]
  %s2 = inlined_call_operand.hbm [shape: f32[2,1,128], index: 2, kind: output, shape index: {1}]
  %3 = xla_tuple %s1, %s2
  %s4 = sld [smem:[#allocation0]]
  $region53: #{tpu_custom_call.1} parent=0
    _
  %s6 = ssub.s32 1, %s4
  %s7 = scalar_select 0, %s6, %s4
  $region1: #{tpu_custom_call.1} parent=0
    #allocation2 [shape = 'u8[8192]{0}', space=vmem, size = 0x2000, scoped, tag = 'input window, operand 0']
    #allocation3 [shape = 's32[2]{0}', space=sflag, size = 0x8, scoped, tag = 'scoped memory for tpu_custom_call.1']
    #allocation4 [shape = 's32[2]{0}', space=sflag, size = 0x8, scoped, tag = 'scoped memory for tpu_custom_call.1']
    #allocation5 [shape = 'u8[8192]{0}', space=vmem, size = 0x2000, scoped, tag = 'output window, operand 0']
    #allocation6 [shape = 'u8[1024]{0}', space=vmem, size = 0x400, scoped, tag = 'output window, operand 1']
    #allocation7 [shape = 's32[2]{0}', space=sflag, size = 0x8, scoped, tag = 'scoped memory for tpu_custom_call.1']
    %8 = vsyncpa [#allocation3], 0
    %s9 = scalar_lea.sflag [#allocation3], 1
    %10 = vsyncpa %s9, 0
    %11 = vsyncpa [#allocation4], 0
    %s12 = scalar_lea.sflag [#allocation4], 1
    %13 = vsyncpa %s12, 0
    %14 = vsyncpa [#allocation7], 0
    %s15 = scalar_lea.sflag [#allocation7], 1
    %16 = vsyncpa %s15, 0
    loop: start=0, step=1, limit=4
    $region2: #{tpu_custom_call.1} parent=1 // loop_pre_header
      _
    $region3: #{tpu_custom_call.1} parent=1 // loop_header
      %s18 = sphi 0, %s22
      %p19 = scmp.ge.s32.totalorder %s18, 4
      %s25 = sphi 0, %s37
      %s26 = sphi 0, %s33
      %s27 = sphi 0, %s25
      %s28 = sphi 0, %s26
      %s29 = sphi 0, %s27
      %s30 = sphi 0, %s28
      %s42 = sphi 0, %s44
      %s45 = sphi 0, %s42
      %s46 = sphi 0, %s45
      %s62 = sphi 0, %s46
      %s70 = sphi 0, %s72
      %s73 = sphi 0, %s70
      %s74 = sphi 0, %s73
      %s90 = sphi 0, %s74
      %s96 = sphi 0, %s98
      %s99 = sphi 0, %s96
      %s100 = sphi 0, %s99
      %s116 = sphi 0, %s100
    $region4: #{tpu_custom_call.1} parent=1 // loop_header_branch
      %21 = sbr.rel (%p19) target = $region8
    $region5: #{tpu_custom_call.1} parent=1 // loop_body
      %s23 = ssub.s32 %s18, 1
      %s24 = ssub.s32 %s18, 2
      %s31 = sadd.s32 1, %s26
      %p32 = scmp.ge.s32.totalorder %s31, 1
      %s33 = scalar_select %p32, 0, %s31
      %s34 = sadd.s32 1, %s25
      %s35 = scalar_select %p32, %s34, %s25
      %p36 = scmp.ge.s32.totalorder %s35, 2
      %s37 = scalar_select %p36, 0, %s35
      %s38 = ssub.s32 %s25, %s37
      %s39 = ssub.s32 %s26, %s33
      %s40 = sor.u32 %s38, %s39
      %p41 = scmp.eq.s32.totalorder %s40, 0
      %s43 = sadd.s32 %s42, 1
      %s44 = scalar_select %p41, %s42, %s43
      %p47 = pneg %p41
      %p48 = scmp.eq.s32.totalorder %s18, 1
      %p49 = por %p47, %p48
      %p50 = scmp.ne.s32.totalorder %s42, %s45
      %p51 = scmp.eq.s32.totalorder %s18, 0
      %p52 = por %p50, %p51
      %p53 = scmp.ne.s32.totalorder %s42, %s45
      %p54 = scmp.eq.s32.totalorder %s23, 1
      %p55 = por %p53, %p54
      %p56 = scmp.ne.s32.totalorder %s45, %s46
      %p57 = scmp.eq.s32.totalorder %s23, 0
      %p58 = por %p56, %p57
      %p59 = scmp.ne.s32.totalorder %s45, %s46
      %p60 = scmp.eq.s32.totalorder %s24, 1
      %p61 = por %p59, %p60
      %p63 = scmp.ne.s32.totalorder %s46, %s62
      %p64 = scmp.eq.s32.totalorder %s24, 0
      %p65 = por %p63, %p64
      %s66 = ssub.s32 %s25, %s37
      %s67 = ssub.s32 %s26, %s33
      %s68 = sor.u32 %s66, %s67
      %p69 = scmp.eq.s32.totalorder %s68, 0
      %s71 = sadd.s32 %s70, 1
      %s72 = scalar_select %p69, %s70, %s71
      %p75 = pneg %p69
      %p76 = scmp.eq.s32.totalorder %s18, 1
      %p77 = por %p75, %p76
      %p78 = scmp.ne.s32.totalorder %s70, %s73
      %p79 = scmp.eq.s32.totalorder %s18, 0
      %p80 = por %p78, %p79
      %p81 = scmp.ne.s32.totalorder %s70, %s73
      %p82 = scmp.eq.s32.totalorder %s23, 1
      %p83 = por %p81, %p82
      %p84 = scmp.ne.s32.totalorder %s73, %s74
      %p85 = scmp.eq.s32.totalorder %s23, 0
      %p86 = por %p84, %p85
      %p87 = scmp.ne.s32.totalorder %s73, %s74
      %p88 = scmp.eq.s32.totalorder %s24, 1
      %p89 = por %p87, %p88
      %p91 = scmp.ne.s32.totalorder %s74, %s90
      %p92 = scmp.eq.s32.totalorder %s24, 0
      %p93 = por %p91, %p92
      %s94 = ssub.s32 %s25, %s37
      %p95 = scmp.eq.s32.totalorder %s94, 0
      %s97 = sadd.s32 %s96, 1
      %s98 = scalar_select %p95, %s96, %s97
      %p101 = pneg %p95
      %p102 = scmp.eq.s32.totalorder %s18, 1
      %p103 = por %p101, %p102
      %p104 = scmp.ne.s32.totalorder %s96, %s99
      %p105 = scmp.eq.s32.totalorder %s18, 0
      %p106 = por %p104, %p105
      %p107 = scmp.ne.s32.totalorder %s96, %s99
      %p108 = scmp.eq.s32.totalorder %s23, 1
      %p109 = por %p107, %p108
      %p110 = scmp.ne.s32.totalorder %s99, %s100
      %p111 = scmp.eq.s32.totalorder %s23, 0
      %p112 = por %p110, %p111
      %p113 = scmp.ne.s32.totalorder %s99, %s100
      %p114 = scmp.eq.s32.totalorder %s24, 1
      %p115 = por %p113, %p114
      %p117 = scmp.ne.s32.totalorder %s100, %s116
      %p118 = scmp.eq.s32.totalorder %s24, 0
      %p119 = por %p117, %p118
      %p120 = scmp.le.s32.totalorder 1, %s18
      %p121 = scmp.lt.s32.totalorder %s18, 3
      %p122 = pnand %p120, %p121
      %p123 = pneg %p122
      // Predicated region
      $region9: #{tpu_custom_call.1} parent=5 // pred_check
        _
      $region10: #{tpu_custom_call.1} parent=5 // pred_check_branch
        %125 = sbr.rel (%p122) target = $region12
      $region11: #{tpu_custom_call.1} parent=5 // pred_region
        %s126 = ssub.s32 %s18, 1
      $region12: #{tpu_custom_call.1} parent=5 // pred_fallthru
        _
      %p127 = scmp.lt.s32.totalorder %s18, 2
      // Predicated region
      $region13: #{tpu_custom_call.1} parent=5 // pred_check
        %p128 = pneg %p127
      $region14: #{tpu_custom_call.1} parent=5 // pred_check_branch
        %130 = sbr.rel (%p128) target = $region16
      $region15: #{tpu_custom_call.1} parent=5 // pred_region
        // Predicated region
        $region17: #{tpu_custom_call.1} parent=15 // pred_check
          %p131 = pneg %p52
        $region18: #{tpu_custom_call.1} parent=15 // pred_check_branch
          %133 = sbr.rel (%p131) target = $region20
        $region19: #{tpu_custom_call.1} parent=15 // pred_region
          %s134 = sand.u32 %s42, 1
          %s135 = scalar_lea.sflag [#allocation3], %s134
          %s136 = sand.u32 %s42, 1
          %s137 = smul.addr %s136, 8
          %s138 = scalar_lea.vmem [#allocation2], %s137
          %s140 = ssub.s32 128, 128
          %141 = vsyncadd %s135, %s140
          %s142 = sadd.s32 %s26, %s25
          %s143 = smul.addr %s142, 128
          %s144 = scalar_lea.hbm %s0, %s143
          %s146 = sshll.u32 %s138, 4
          %s147 = int_to_ptr.vmem [resolvable:$true] %s146
          %149 = dma.hbm_to_vmem [thread:$0]  %s144, 128, %s147, %s135
        $region20: #{tpu_custom_call.1} parent=15 // pred_fallthru
          _
      $region16: #{tpu_custom_call.1} parent=5 // pred_fallthru
        _
      %p150 = scmp.le.s32.totalorder 1, %s18
      %p151 = scmp.lt.s32.totalorder %s18, 3
      %p152 = pnand %p150, %p151
      %p153 = pneg %p152
      // Predicated region
      $region21: #{tpu_custom_call.1} parent=5 // pred_check
        _
      $region22: #{tpu_custom_call.1} parent=5 // pred_check_branch
        %155 = sbr.rel (%p152) target = $region24
      $region23: #{tpu_custom_call.1} parent=5 // pred_region
        %s156 = ssub.s32 %s18, 1
        %s157 = sand.u32 %s45, 1
        %s158 = scalar_lea.sflag [#allocation3], %s157
        %s159 = sand.u32 %s45, 1
        %s160 = smul.addr %s159, 8
        %s161 = scalar_lea.vmem [#allocation2], %s160
        // Predicated region
        $region25: #{tpu_custom_call.1} parent=23 // pred_check
          %p162 = pneg %p58
        $region26: #{tpu_custom_call.1} parent=23 // pred_check_branch
          %164 = sbr.rel (%p162) target = $region28
        $region27: #{tpu_custom_call.1} parent=23 // pred_region
          %165 = dma.done %s158, 128
        $region28: #{tpu_custom_call.1} parent=23 // pred_fallthru
          _
        %s166 = sand.u32 %s45, 1
        %s167 = scalar_lea.sflag [#allocation3], %s166
        %s168 = sand.u32 %s45, 1
        %s169 = smul.addr %s168, 8
        %s170 = scalar_lea.vmem [#allocation2], %s169
        %p171 = pneg %p58
        %p172 = pneg %p55
        %p173 = pneg %p86
        %p174 = pneg %p83
        %s175 = sand.u32 %s73, 1
        %s176 = scalar_lea.sflag [#allocation4], %s175
        %s177 = sand.u32 %s73, 1
        %s178 = smul.addr %s177, 8
        %s179 = scalar_lea.vmem [#allocation5], %s178
        %p180 = pneg %p112
        %p181 = pneg %p109
        %s182 = sand.u32 %s99, 1
        %s183 = scalar_lea.sflag [#allocation7], %s182
        %s184 = sand.u32 %s99, 1
        %s185 = scalar_lea.vmem [#allocation6], %s184
        %p186 = scmp.eq.s32.totalorder %s28, 0
        // Predicated region
        $region29: #{tpu_custom_call.1} parent=23 // pred_check
          %p187 = pneg %p186
        $region30: #{tpu_custom_call.1} parent=23 // pred_check_branch
          %189 = sbr.rel (%p187) target = $region32
        $region31: #{tpu_custom_call.1} parent=23 // pred_region
          %190 = vst [vmem:[%s185] sm:$0x1] 0.0
        $region32: #{tpu_custom_call.1} parent=23 // pred_fallthru
          _
        %v191 = vld [vmem:[%s161] sm:$0xff]
        %v192 = vand.u32 2147483647, %v191
        %v193 = vsub.f32 0.0, %v192
        %v194 = vmul.f32 %v193, 1.442695
        %v195 = vpow.pop %v194
        %v196 = vadd.f32 %v195, 1.0
        %v197 = vrcp.pop %v196
        %v198 = vmul.f32 1.0, %v197
        %vm199 = vcmp.ge.f32.partialorder %v191, 0.0
        %v200 = vmul.f32 %v195, %v198
        %v201 = vsel %vm199, %v198, %v200
        %v202 = vsub.f32 %v201, 1e-06
        %v203 = vmul.f32 %v202, 1.000002
        %204 = vst [vmem:[%s179] sm:$0xff] %v203
        %v205 = vadd.f32 %v195, 1.0
        %v206 = vlog2.pop %v205
        %v207 = vmul.f32 %v206, 0.6931472
        %v208 = vmul.f32 -0.5, %v195
        %v209 = vadd.f32 %v208, 1.0
        %v210 = vmul.f32 %v209, %v195
        %v211 = vand.u32 2147483647, %v195
        %vm212 = vcmp.lt.f32.partialorder %v211, 0.0004427343
        %v213 = vsel %vm212, %v210, %v207
        %v214 = vmul.f32 %v213, 2.0
        %v215 = vadd.f32 %v192, %v214
        %v216 = vadd.f32 %v215, -2.000002e-06
        %v217 = vld [vmem:[%s185] sm:$0x1]
        %v218 = vrot.slane %v216, 4
        %v219 = vadd.f32 %v216, %v218
        %v220 = vrot.slane %v219, 2
        %v221 = vadd.f32 %v219, %v220
        %v222 = vrot.slane %v221, 1
        %v223 = vadd.f32 %v221, %v222
        %v224 = vadd.f32 %v217, %v223
        %225 = vst [vmem:[%s185] sm:$0x1] %v224
        %s226 = sand.u32 %s73, 1
        %s227 = scalar_lea.sflag [#allocation4], %s226
        %s228 = sand.u32 %s73, 1
        %s229 = smul.addr %s228, 8
        %s230 = scalar_lea.vmem [#allocation5], %s229
        %s231 = sand.u32 %s99, 1
        %s232 = scalar_lea.sflag [#allocation7], %s231
        %s233 = sand.u32 %s99, 1
        %s234 = scalar_lea.vmem [#allocation6], %s233
        // Predicated region
        $region33: #{tpu_custom_call.1} parent=23 // pred_check
          %p235 = pneg %p83
        $region34: #{tpu_custom_call.1} parent=23 // pred_check_branch
          %237 = sbr.rel (%p235) target = $region36
        $region35: #{tpu_custom_call.1} parent=23 // pred_region
          %s239 = ssub.s32 128, 128
          %240 = vsyncadd %s227, %s239
          %s241 = sadd.s32 %s28, %s27
          %s242 = smul.addr %s241, 128
          %s243 = scalar_lea.hbm %s1, %s242
          %s245 = sshll.u32 %s230, 4
          %s246 = int_to_ptr.vmem [resolvable:$true] %s245
          %248 = dma.vmem_to_hbm [thread:$0]  %s246, 128, %s243, %s227
        $region36: #{tpu_custom_call.1} parent=23 // pred_fallthru
          _
        // Predicated region
        $region37: #{tpu_custom_call.1} parent=23 // pred_check
          %p249 = pneg %p109
        $region38: #{tpu_custom_call.1} parent=23 // pred_check_branch
          %251 = sbr.rel (%p249) target = $region40
        $region39: #{tpu_custom_call.1} parent=23 // pred_region
          %s253 = ssub.s32 16, 16
          %254 = vsyncadd %s232, %s253
          %s255 = smul.addr %s27, 16
          %s256 = scalar_lea.hbm %s2, %s255
          %s258 = sshll.u32 %s234, 4
          %s259 = int_to_ptr.vmem [resolvable:$true] %s258
          %261 = dma.vmem_to_hbm [thread:$0]  %s259, 16, %s256, %s232
        $region40: #{tpu_custom_call.1} parent=23 // pred_fallthru
          _
      $region24: #{tpu_custom_call.1} parent=5 // pred_fallthru
        _
      %p262 = scmp.le.s32.totalorder 2, %s18
      // Predicated region
      $region41: #{tpu_custom_call.1} parent=5 // pred_check
        %p263 = pneg %p262
      $region42: #{tpu_custom_call.1} parent=5 // pred_check_branch
        %265 = sbr.rel (%p263) target = $region44
      $region43: #{tpu_custom_call.1} parent=5 // pred_region
        %s266 = ssub.s32 %s18, 2
        // Predicated region
        $region45: #{tpu_custom_call.1} parent=43 // pred_check
          %p267 = pneg %p89
        $region46: #{tpu_custom_call.1} parent=43 // pred_check_branch
          %269 = sbr.rel (%p267) target = $region48
        $region47: #{tpu_custom_call.1} parent=43 // pred_region
          %s270 = sand.u32 %s74, 1
          %s271 = scalar_lea.sflag [#allocation4], %s270
          %s272 = sand.u32 %s74, 1
          %s273 = smul.addr %s272, 8
          %s274 = scalar_lea.vmem [#allocation5], %s273
          %275 = dma.done %s271, 128
        $region48: #{tpu_custom_call.1} parent=43 // pred_fallthru
          _
        // Predicated region
        $region49: #{tpu_custom_call.1} parent=43 // pred_check
          %p276 = pneg %p115
        $region50: #{tpu_custom_call.1} parent=43 // pred_check_branch
          %278 = sbr.rel (%p276) target = $region52
        $region51: #{tpu_custom_call.1} parent=43 // pred_region
          %s279 = sand.u32 %s100, 1
          %s280 = scalar_lea.sflag [#allocation7], %s279
          %s281 = sand.u32 %s100, 1
          %s282 = scalar_lea.vmem [#allocation6], %s281
          %283 = dma.done %s280, 16
        $region52: #{tpu_custom_call.1} parent=43 // pred_fallthru
          _
      $region44: #{tpu_custom_call.1} parent=5 // pred_fallthru
        _
    $region6: #{tpu_custom_call.1} parent=1 // loop_footer
      %s22 = sadd.s32 1, %s18
    $region7: #{tpu_custom_call.1} parent=1 // loop_footer_branch
      %17 = sbr.rel target = $region3
    $region8: #{tpu_custom_call.1} parent=1 // loop_exit
      _
    %284 = vsyncpa [#allocation3], 1
    %s285 = scalar_lea.sflag [#allocation3], 1
    %286 = vsyncpa %s285, 1
    %287 = vsyncpa [#allocation4], 1
    %s288 = scalar_lea.sflag [#allocation4], 1
    %289 = vsyncpa %s288, 1
    %290 = vsyncpa [#allocation7], 1
    %s291 = scalar_lea.sflag [#allocation7], 1
    %292 = vsyncpa %s291, 1

</llo_original>
